<compile_context>
chip_gen: v5e
topology: v5e:2x2
jax: 0.10.0
libtpu: 0.0.40
codegen_flags: <defaults>
</compile_context>

<pallas_src>
import functools

import jax
import jax.numpy as jnp
from jax.experimental import pallas as pl
from jax.experimental.pallas import tpu as pltpu

LANE = 128
SUBLANE = 8
_MIB = 1 << 20


def _round_up(n, m):
    return ((n + m - 1) // m) * m


# --------------------------------------------------------------------------- #
# Kernel
# --------------------------------------------------------------------------- #
def _dueling_kernel(num_body_layers, *refs):
    """Fused MLP body (bf16 weights, f32 accumulate) + folded dueling head (f32).

    refs layout (all VMEM):
      x_ref                              # (TB, K0p) bf16
      (w_ref, b_ref) * num_body_layers   # W (Kp, Hp) bf16, b (1, Hp) f32
      wh_ref, bh_ref                     # folded dueling head, f32
      q_ref                              # (TB, A) f32 output
    """
    it = iter(refs)
    x_ref = next(it)
    body = [(next(it), next(it)) for _ in range(num_body_layers)]
    wh_ref, bh_ref = next(it), next(it)
    q_ref = next(it)

    h_bf16 = x_ref[...]
    h_f32 = None
    for w_ref, b_ref in body:
        z = jnp.dot(h_bf16, w_ref[...], preferred_element_type=jnp.float32)
        h_f32 = jnp.maximum(z + b_ref[...], 0.0)          # bias + ReLU in f32
        h_bf16 = h_f32.astype(jnp.bfloat16)               # bf16 operand for next MXU pass

    # Head kept entirely in f32: tiny matmul, preserves argmax fidelity.
    q = jnp.dot(h_f32, wh_ref[...], preferred_element_type=jnp.float32) + bh_ref[...]
    q_ref[...] = q.astype(q_ref.dtype)


# --------------------------------------------------------------------------- #
# Parameters
# --------------------------------------------------------------------------- #
def init_params(key, input_dim, output_dim, hidden_dims):
    """PyTorch nn.Linear-style uniform fan-in init.

    Weights stored transposed vs nn.Linear: shape (in, out). Biases (1, out).
    Ordering: input layer, hidden layers..., value head, advantage head.
    """
    dims = [input_dim] + list(hidden_dims)
    layer_shapes = [(dims[i], dims[i + 1]) for i in range(len(dims) - 1)]
    layer_shapes.append((hidden_dims[-1], 1))            # value head
    layer_shapes.append((hidden_dims[-1], output_dim))   # advantage head

    params = []
    for fan_in, fan_out in layer_shapes:
        key, kw, kb = jax.random.split(key, 3)
        bound = 1.0 / jnp.sqrt(fan_in)
        w = jax.random.uniform(kw, (fan_in, fan_out), jnp.float32, -bound, bound)
        b = jax.random.uniform(kb, (1, fan_out), jnp.float32, -bound, bound)
        params.append((w, b))
    return params


def prepare_params(params, input_dim, output_dim):
    """One-time parameter preparation (hoisted out of the per-forward path).

      * Fold value + advantage heads into one head (exact by linearity):
          W_h = (W_a - mean(W_a, axis=1)) + W_v,  b_h = (b_a - mean(b_a)) + b_v
      * Zero-pad the input dim and every hidden dim to multiples of 128 so all
        activation tiles are lane-dense (exact: padded rows/cols are zero and
        ReLU(0) = 0 propagates zeros).
      * Cast body weights to bf16 (MXU-native, half the DMA bytes); biases and
        the head stay f32.
    """
    assert len(params) >= 3, "need at least the input layer + two heads"
    body = params[:-2]
    (wv, bv), (wa, ba) = params[-2], params[-1]

    w_head = (wa - jnp.mean(wa, axis=1, keepdims=True)) + wv      # (H, A)
    b_head = (ba - jnp.mean(ba, axis=1, keepdims=True)) + bv      # (1, A)

    k0_pad = _round_up(input_dim, LANE)
    body_prepared = []
    in_pad = k0_pad
    for w, b in body:
        d_in, d_out = w.shape
        out_pad = _round_up(d_out, LANE)
        wp = jnp.zeros((in_pad, out_pad), jnp.float32).at[:d_in, :d_out].set(w)
        bp = jnp.zeros((1, out_pad), jnp.float32).at[:, :d_out].set(b)
        body_prepared.append((wp.astype(jnp.bfloat16), bp))
        in_pad = out_pad

    h_last, a_dim = w_head.shape
    wh = jnp.zeros((in_pad, a_dim), jnp.float32).at[:h_last, :].set(w_head)
    bh = b_head.astype(jnp.float32)

    return {
        "body": body_prepared,
        "head": (wh, bh),
        "input_dim": input_dim,
        "k0_pad": k0_pad,
        "output_dim": output_dim,
    }


# --------------------------------------------------------------------------- #
# Forward
# --------------------------------------------------------------------------- #
def _pick_batch_tile(batch):
    """Per-generation batch tile.

    v5e: 128 (128x128 MXU already saturated; bigger tiles risk vst-slot spills).
    v6e/v7x: 256 (256x256 MXU rows + amortizes ~0.35us/step grid overhead).
    v7x: additionally keep the grid length even so both TensorCores get work.
    """
    try:
        kind = jax.devices()[0].device_kind.lower()
    except Exception:  # pragma: no cover
        kind = ""
    tb = 128 if "v5" in kind else 256
    if batch <= tb:
        return batch                         # single tile == full batch
    if "v7" in kind:
        gb = pl.cdiv(batch, tb)
        if gb % 2 == 1:
            gb += 1
            tb = _round_up(pl.cdiv(batch, gb), SUBLANE)
    return tb


def dueling_dense_q_forward(x, prepared):
    """Fused Pallas forward.  x: (batch, input_dim) f32 -> (batch, output_dim) f32."""
    batch, input_dim = x.shape
    assert input_dim == prepared["input_dim"]
    body = prepared["body"]
    wh, bh = prepared["head"]
    k0_pad = prepared["k0_pad"]
    output_dim = prepared["output_dim"]

    tb = _pick_batch_tile(batch)
    grid_b = pl.cdiv(batch, tb)
    padded_batch = grid_b * tb

    # x is the only batch-scaled input: ship it as bf16 (half the HBM->VMEM
    # bytes) and lane-dense (input_dim zero-padded to a multiple of 128).
    xp = x.astype(jnp.bfloat16)
    if k0_pad != input_dim or padded_batch != batch:
        xp = jnp.pad(xp, ((0, padded_batch - batch), (0, k0_pad - input_dim)))

    flat_inputs = [xp]
    in_specs = [pl.BlockSpec((tb, k0_pad), lambda i: (i, 0))]
    for w, b in body:
        flat_inputs += [w, b]
        # Constant index_map -> weights/biases stay VMEM-resident across batch tiles.
        in_specs += [pl.BlockSpec(w.shape, lambda i: (0, 0)),
                     pl.BlockSpec(b.shape, lambda i: (0, 0))]
    flat_inputs += [wh, bh]
    in_specs += [pl.BlockSpec(wh.shape, lambda i: (0, 0)),
                 pl.BlockSpec(bh.shape, lambda i: (0, 0))]

    # Compact output block: last dim == full output_dim (allowed), avoids the
    # 32x-inflated lane-padded writeback of the previous version.
    out_specs = pl.BlockSpec((tb, output_dim), lambda i: (i, 0))
    out_shape = jax.ShapeDtypeStruct((padded_batch, output_dim), jnp.float32)

    # Scoped-VMEM budget: double-buffered x/out tiles + resident weights, 25%
    # headroom, capped at 64 MiB (valid on every generation incl. v7x).
    block_bytes = tb * k0_pad * 2 + tb * output_dim * 4
    weight_bytes = sum(int(a.size) * a.dtype.itemsize for a in flat_inputs[1:])
    needed = 2 * (block_bytes + weight_bytes)
    vmem_limit = int(min(max(needed * 5 // 4, 32 * _MIB), 64 * _MIB))

    layer_dims = [(w.shape[0], w.shape[1]) for w, _ in body] + [wh.shape]
    flops = 2 * padded_batch * sum(fi * fo for fi, fo in layer_dims)
    bytes_accessed = int(xp.size) * 2 + weight_bytes + padded_batch * output_dim * 4

    kernel = functools.partial(_dueling_kernel, len(body))
    q = pl.pallas_call(
        kernel,
        out_shape=out_shape,
        grid_spec=pltpu.PrefetchScalarGridSpec(
            num_scalar_prefetch=0,
            grid=(grid_b,),
            in_specs=in_specs,
            out_specs=out_specs,
        ),
        compiler_params=pltpu.CompilerParams(
            dimension_semantics=("parallel",),   # batch tiles shard over v7x's 2 TCs
            vmem_limit_bytes=vmem_limit,
        ),
        cost_estimate=pl.CostEstimate(
            flops=int(flops), transcendentals=0, bytes_accessed=int(bytes_accessed)),
    )(*flat_inputs)

    if padded_batch != batch:
        q = q[:batch]
    return q


# --------------------------------------------------------------------------- #
# References
# --------------------------------------------------------------------------- #
def reference_forward(x, params):
    """Pure-JAX f32 reference (original unfused dueling math, HIGHEST precision)."""
    dot = functools.partial(jnp.dot, precision=jax.lax.Precision.HIGHEST)
    h = x
    for w, b in params[:-2]:
        h = jnp.maximum(dot(h, w) + b, 0.0)
    wv, bv = params[-2]
    wa, ba = params[-1]
    a = dot(h, wa) + ba
    v = dot(h, wv) + bv
    return v + a - jnp.mean(a, axis=1, keepdims=True)


def reference_forward_bf16_body(x, prepared):
    """Reference using the same prepared (bf16, padded, folded) params as the kernel."""
    dot = functools.partial(jnp.dot, precision=jax.lax.Precision.HIGHEST,
                            preferred_element_type=jnp.float32)
    k0_pad = prepared["k0_pad"]
    h_bf16 = jnp.pad(x.astype(jnp.bfloat16), ((0, 0), (0, k0_pad - x.shape[1])))
    h_f32 = None
    for w, b in prepared["body"]:
        h_f32 = jnp.maximum(dot(h_bf16, w) + b, 0.0)
        h_bf16 = h_f32.astype(jnp.bfloat16)
    wh, bh = prepared["head"]
    return dot(h_f32, wh) + bh


# --------------------------------------------------------------------------- #
# Test
# --------------------------------------------------------------------------- #
if __name__ == "__main__":
    # Small shapes consistent with the module: a dense Q-network over flat states.
    batch = 8
    input_dim = 16
    hidden_dims = (32, 32)
    output_dim = 4

    key = jax.random.PRNGKey(0)
    key, kx = jax.random.split(key)
    x = jax.random.normal(kx, (batch, input_dim), jnp.float32)

    params = init_params(key, input_dim, output_dim, hidden_dims)
    prepared = prepare_params(params, input_dim, output_dim)   # one-time prep

    q = dueling_dense_q_forward(x, prepared)
    q = jax.block_until_ready(q)
    assert q.shape == (batch, output_dim)

    # Tight check vs a reference applying the exact same bf16 body weights,
    # and a bf16-mantissa-derived check vs the pure-f32 module math.
    q_ref_bf16 = reference_forward_bf16_body(x, prepared)
    q_ref_f32 = reference_forward(x, params)
    assert jnp.allclose(q, q_ref_bf16, atol=1e-3, rtol=1e-3), "mismatch vs bf16-body reference"
    assert jnp.allclose(q, q_ref_f32, atol=1e-2, rtol=1e-2), "mismatch vs f32 reference"

    print("KERNEL_OK")
</pallas_src>

<mosaic_0001>
module attributes {stable_mosaic.version = 11 : i64} {
  func.func @_dueling_kernel(%arg0: i32, %arg1: memref<8x128xbf16, #tpu.memory_space<vmem>>, %arg2: memref<128x128xbf16, #tpu.memory_space<vmem>>, %arg3: memref<1x128xf32, #tpu.memory_space<vmem>>, %arg4: memref<128x128xbf16, #tpu.memory_space<vmem>>, %arg5: memref<1x128xf32, #tpu.memory_space<vmem>>, %arg6: memref<128x4xf32, #tpu.memory_space<vmem>>, %arg7: memref<1x4xf32, #tpu.memory_space<vmem>>, %arg8: memref<8x4xf32, #tpu.memory_space<vmem>>) attributes {dimension_semantics = [#tpu.dimension_semantics<parallel>], iteration_bounds = array<i64: 1>, scalar_prefetch = 0 : i64, scratch_operands = 0 : i64, tpu.core_type = #tpu.core_type<tc>, window_params = [{transform_indices = @transform_0, window_bounds = array<i64: 8, 128>}, {pipeline_mode = #tpu.pipeline_mode<synchronous>, transform_indices = @transform_1, window_bounds = array<i64: 128, 128>}, {pipeline_mode = #tpu.pipeline_mode<synchronous>, transform_indices = @transform_2, window_bounds = array<i64: 1, 128>}, {pipeline_mode = #tpu.pipeline_mode<synchronous>, transform_indices = @transform_3, window_bounds = array<i64: 128, 128>}, {pipeline_mode = #tpu.pipeline_mode<synchronous>, transform_indices = @transform_4, window_bounds = array<i64: 1, 128>}, {pipeline_mode = #tpu.pipeline_mode<synchronous>, transform_indices = @transform_5, window_bounds = array<i64: 128, 4>}, {pipeline_mode = #tpu.pipeline_mode<synchronous>, transform_indices = @transform_6, window_bounds = array<i64: 1, 4>}, {transform_indices = @transform_7, window_bounds = array<i64: 8, 4>}]} {
    %c0 = arith.constant 0 : index
    %c0_0 = arith.constant 0 : index
    %0 = vector.load %arg1[%c0, %c0_0] : memref<8x128xbf16, #tpu.memory_space<vmem>>, vector<8x128xbf16>
    %c0_1 = arith.constant 0 : index
    %c0_2 = arith.constant 0 : index
    %1 = vector.load %arg2[%c0_1, %c0_2] : memref<128x128xbf16, #tpu.memory_space<vmem>>, vector<128x128xbf16>
    %cst = arith.constant dense<0.000000e+00> : vector<8x128xf32>
    %2 = tpu.matmul %0, %1, %cst {dimension_numbers = #tpu.dot_dimension_numbers<[1], [0], [0], [1], [0, 0, 1, 1], [], []>} : vector<8x128xbf16>, vector<128x128xbf16>, vector<8x128xf32> -> vector<8x128xf32>
    %c0_3 = arith.constant 0 : index
    %c0_4 = arith.constant 0 : index
    %3 = vector.load %arg3[%c0_3, %c0_4] : memref<1x128xf32, #tpu.memory_space<vmem>>, vector<1x128xf32>
    %4 = vector.broadcast %3 : vector<1x128xf32> to vector<8x128xf32>
    %5 = arith.addf %2, %4 : vector<8x128xf32>
    %cst_5 = arith.constant 0.000000e+00 : f32
    %6 = vector.broadcast %cst_5 : f32 to vector<8x128xf32>
    %7 = arith.maximumf %5, %6 : vector<8x128xf32>
    %8 = arith.truncf %7 : vector<8x128xf32> to vector<8x128xbf16>
    %c0_6 = arith.constant 0 : index
    %c0_7 = arith.constant 0 : index
    %9 = vector.load %arg4[%c0_6, %c0_7] : memref<128x128xbf16, #tpu.memory_space<vmem>>, vector<128x128xbf16>
    %cst_8 = arith.constant dense<0.000000e+00> : vector<8x128xf32>
    %10 = tpu.matmul %8, %9, %cst_8 {dimension_numbers = #tpu.dot_dimension_numbers<[1], [0], [0], [1], [0, 0, 1, 1], [], []>} : vector<8x128xbf16>, vector<128x128xbf16>, vector<8x128xf32> -> vector<8x128xf32>
    %c0_9 = arith.constant 0 : index
    %c0_10 = arith.constant 0 : index
    %11 = vector.load %arg5[%c0_9, %c0_10] : memref<1x128xf32, #tpu.memory_space<vmem>>, vector<1x128xf32>
    %12 = vector.broadcast %11 : vector<1x128xf32> to vector<8x128xf32>
    %13 = arith.addf %10, %12 : vector<8x128xf32>
    %cst_11 = arith.constant 0.000000e+00 : f32
    %14 = vector.broadcast %cst_11 : f32 to vector<8x128xf32>
    %15 = arith.maximumf %13, %14 : vector<8x128xf32>
    %c0_12 = arith.constant 0 : index
    %c0_13 = arith.constant 0 : index
    %16 = vector.load %arg6[%c0_12, %c0_13] : memref<128x4xf32, #tpu.memory_space<vmem>>, vector<128x4xf32>
    %cst_14 = arith.constant dense<0.000000e+00> : vector<8x4xf32>
    %17 = tpu.matmul %15, %16, %cst_14 {dimension_numbers = #tpu.dot_dimension_numbers<[1], [0], [0], [1], [0, 0, 1, 1], [], []>} : vector<8x128xf32>, vector<128x4xf32>, vector<8x4xf32> -> vector<8x4xf32>
    %c0_15 = arith.constant 0 : index
    %c0_16 = arith.constant 0 : index
    %18 = vector.load %arg7[%c0_15, %c0_16] : memref<1x4xf32, #tpu.memory_space<vmem>>, vector<1x4xf32>
    %19 = vector.broadcast %18 : vector<1x4xf32> to vector<8x4xf32>
    %20 = arith.addf %17, %19 : vector<8x4xf32>
    %c0_17 = arith.constant 0 : index
    %c0_18 = arith.constant 0 : index
    %21 = vector.load %arg8[%c0_17, %c0_18] : memref<8x4xf32, #tpu.memory_space<vmem>>, vector<8x4xf32>
    tpu.vector_store %arg8[%c0_17, %c0_18], %20 {strides = array<i32>} : memref<8x4xf32, #tpu.memory_space<vmem>>, vector<8x4xf32>,
    return
  }
  func.func @transform_0(%arg0: i32) -> (i32, i32) {
    %c0_i32 = arith.constant 0 : i32
    %c0_i32_0 = arith.constant 0 : i32
    return %arg0, %c0_i32 : i32, i32
  }
  func.func @transform_1(%arg0: i32) -> (i32, i32) {
    %c0_i32 = arith.constant 0 : i32
    %c0_i32_0 = arith.constant 0 : i32
    %c0_i32_1 = arith.constant 0 : i32
    return %c0_i32, %c0_i32_0 : i32, i32
  }
  func.func @transform_2(%arg0: i32) -> (i32, i32) {
    %c0_i32 = arith.constant 0 : i32
    %c0_i32_0 = arith.constant 0 : i32
    %c0_i32_1 = arith.constant 0 : i32
    return %c0_i32, %c0_i32_0 : i32, i32
  }
  func.func @transform_3(%arg0: i32) -> (i32, i32) {
    %c0_i32 = arith.constant 0 : i32
    %c0_i32_0 = arith.constant 0 : i32
    %c0_i32_1 = arith.constant 0 : i32
    return %c0_i32, %c0_i32_0 : i32, i32
  }
  func.func @transform_4(%arg0: i32) -> (i32, i32) {
    %c0_i32 = arith.constant 0 : i32
    %c0_i32_0 = arith.constant 0 : i32
    %c0_i32_1 = arith.constant 0 : i32
    return %c0_i32, %c0_i32_0 : i32, i32
  }
  func.func @transform_5(%arg0: i32) -> (i32, i32) {
    %c0_i32 = arith.constant 0 : i32
    %c0_i32_0 = arith.constant 0 : i32
    %c0_i32_1 = arith.constant 0 : i32
    return %c0_i32, %c0_i32_0 : i32, i32
  }
  func.func @transform_6(%arg0: i32) -> (i32, i32) {
    %c0_i32 = arith.constant 0 : i32
    %c0_i32_0 = arith.constant 0 : i32
    %c0_i32_1 = arith.constant 0 : i32
    return %c0_i32, %c0_i32_0 : i32, i32
  }
  func.func @transform_7(%arg0: i32) -> (i32, i32) {
    %c0_i32 = arith.constant 0 : i32
    %c0_i32_0 = arith.constant 0 : i32
    return %arg0, %c0_i32 : i32, i32
  }
}

</mosaic_0001>

<llo_original>
// kernel: tpu_custom_call.1
$region0: #{tpu_custom_call.1}
  #allocation0 [shape = 'u32[]', space=smem, size = 0x4, offset = 0x4, fixed_abs, tag = 'smem constant byte address 0x4 - core index']
  #allocation1 [shape = 'u32[72,128]{1,0:T(1,128)}', space=vmem, size = 0x9000, scoped, tag = 'internal scratch']
  %s0 = inlined_call_operand.vmem [shape: bf16[8,128], index: 0, kind: input, shape index: {}]
  %s1 = inlined_call_operand.vmem [shape: bf16[128,128], index: 1, kind: input, shape index: {}]
  %s2 = inlined_call_operand.hbm [shape: f32[1,128], index: 2, kind: input, shape index: {}]
  %s3 = inlined_call_operand.vmem [shape: bf16[128,128], index: 3, kind: input, shape index: {}]
  %s4 = inlined_call_operand.hbm [shape: f32[1,128], index: 4, kind: input, shape index: {}]
  %s5 = inlined_call_operand.vmem [shape: f32[128,4], index: 5, kind: input, shape index: {}]
  %s6 = inlined_call_operand.vmem [shape: f32[1,4], index: 6, kind: input, shape index: {}]
  %s7 = inlined_call_operand.vmem [shape: f32[8,4], index: 7, kind: output, shape index: {}]
  %s8 = sld [smem:[#allocation0]]
  $region46: #{tpu_custom_call.1} parent=0
    _
  %s10 = ssub.s32 1, %s8
  %s11 = scalar_select 0, %s10, %s8
  $region1: #{tpu_custom_call.1} parent=0
    #allocation2 [shape = 'u8[512]{0}', space=vmem, size = 0x400, scoped, tag = 'input window, operand 2, single buffered']
    #allocation3 [shape = 's32[1]{0}', space=sflag, size = 0x4, scoped, tag = 'scoped memory for tpu_custom_call.1']
    #allocation4 [shape = 'u8[512]{0}', space=vmem, size = 0x400, scoped, tag = 'input window, operand 4, single buffered']
    #allocation5 [shape = 's32[1]{0}', space=sflag, size = 0x4, scoped, tag = 'scoped memory for tpu_custom_call.1']
    %12 = vsyncpa [#allocation3], 0
    %13 = vsyncpa [#allocation5], 0
    // Predicated region
    $region2: #{tpu_custom_call.1} parent=1 // pred_check
      _
    $region3: #{tpu_custom_call.1} parent=1 // pred_check_branch
      %15 = sbr.rel (0) target = $region5
    $region4: #{tpu_custom_call.1} parent=1 // pred_region
      _
    $region5: #{tpu_custom_call.1} parent=1 // pred_fallthru
      _
    // Predicated region
    $region6: #{tpu_custom_call.1} parent=1 // pred_check
      _
    $region7: #{tpu_custom_call.1} parent=1 // pred_check_branch
      %17 = sbr.rel (0) target = $region9
    $region8: #{tpu_custom_call.1} parent=1 // pred_region
      _
    $region9: #{tpu_custom_call.1} parent=1 // pred_fallthru
      _
    // Predicated region
    $region10: #{tpu_custom_call.1} parent=1 // pred_check
      _
    $region11: #{tpu_custom_call.1} parent=1 // pred_check_branch
      %19 = sbr.rel (0) target = $region13
    $region12: #{tpu_custom_call.1} parent=1 // pred_region
      %21 = vsyncadd [#allocation3], 0
      %s23 = sshll.u32 %s2, 4
      %s24 = int_to_ptr.hbm [resolvable:$true] %s23
      %s25 = sshll.u32 [#allocation2], 4
      %s26 = int_to_ptr.vmem [resolvable:$true] %s25
      %28 = dma.hbm_to_vmem [thread:$0]  %s24, 16, %s26, [#allocation3]
    $region13: #{tpu_custom_call.1} parent=1 // pred_fallthru
      _
    // Predicated region
    $region14: #{tpu_custom_call.1} parent=1 // pred_check
      _
    $region15: #{tpu_custom_call.1} parent=1 // pred_check_branch
      %30 = sbr.rel (0) target = $region17
    $region16: #{tpu_custom_call.1} parent=1 // pred_region
      _
    $region17: #{tpu_custom_call.1} parent=1 // pred_fallthru
      _
    // Predicated region
    $region18: #{tpu_custom_call.1} parent=1 // pred_check
      _
    $region19: #{tpu_custom_call.1} parent=1 // pred_check_branch
      %32 = sbr.rel (0) target = $region21
    $region20: #{tpu_custom_call.1} parent=1 // pred_region
      %34 = vsyncadd [#allocation5], 0
      %s36 = sshll.u32 %s4, 4
      %s37 = int_to_ptr.hbm [resolvable:$true] %s36
      %s38 = sshll.u32 [#allocation4], 4
      %s39 = int_to_ptr.vmem [resolvable:$true] %s38
      %41 = dma.hbm_to_vmem [thread:$0]  %s37, 16, %s39, [#allocation5]
    $region21: #{tpu_custom_call.1} parent=1 // pred_fallthru
      _
    // Predicated region
    $region22: #{tpu_custom_call.1} parent=1 // pred_check
      _
    $region23: #{tpu_custom_call.1} parent=1 // pred_check_branch
      %43 = sbr.rel (0) target = $region25
    $region24: #{tpu_custom_call.1} parent=1 // pred_region
      _
    $region25: #{tpu_custom_call.1} parent=1 // pred_fallthru
      _
    // Predicated region
    $region26: #{tpu_custom_call.1} parent=1 // pred_check
      _
    $region27: #{tpu_custom_call.1} parent=1 // pred_check_branch
      %45 = sbr.rel (0) target = $region29
    $region28: #{tpu_custom_call.1} parent=1 // pred_region
      _
    $region29: #{tpu_custom_call.1} parent=1 // pred_fallthru
      _
    // Predicated region
    $region30: #{tpu_custom_call.1} parent=1 // pred_check
      _
    $region31: #{tpu_custom_call.1} parent=1 // pred_check_branch
      %47 = sbr.rel (0) target = $region33
    $region32: #{tpu_custom_call.1} parent=1 // pred_region
      %49 = dma.done [#allocation3], 16
    $region33: #{tpu_custom_call.1} parent=1 // pred_fallthru
      _
    // Predicated region
    $region34: #{tpu_custom_call.1} parent=1 // pred_check
      _
    $region35: #{tpu_custom_call.1} parent=1 // pred_check_branch
      %51 = sbr.rel (0) target = $region37
    $region36: #{tpu_custom_call.1} parent=1 // pred_region
      %53 = dma.done [#allocation5], 16
    $region37: #{tpu_custom_call.1} parent=1 // pred_fallthru
      _
    %v54 = vld [vmem:[%s0] sm:$0xf]
    %v55 = vld [vmem:[%s1] sm:$0xf]
    %v56 = vld [vmem:[%s1 + $0x4] sm:$0xf]
    %v57 = vld [vmem:[%s1 + $0x8] sm:$0xf]
    %v58 = vld [vmem:[%s1 + $0xc] sm:$0xf]
    %v59 = vld [vmem:[%s1 + $0x10] sm:$0xf]
    %v60 = vld [vmem:[%s1 + $0x14] sm:$0xf]
    %v61 = vld [vmem:[%s1 + $0x18] sm:$0xf]
    %v62 = vld [vmem:[%s1 + $0x1c] sm:$0xf]
    %v63 = vld [vmem:[%s1 + $0x20] sm:$0xf]
    %v64 = vld [vmem:[%s1 + $0x24] sm:$0xf]
    %v65 = vld [vmem:[%s1 + $0x28] sm:$0xf]
    %v66 = vld [vmem:[%s1 + $0x2c] sm:$0xf]
    %v67 = vld [vmem:[%s1 + $0x30] sm:$0xf]
    %v68 = vld [vmem:[%s1 + $0x34] sm:$0xf]
    %v69 = vld [vmem:[%s1 + $0x38] sm:$0xf]
    %v70 = vld [vmem:[%s1 + $0x3c] sm:$0xf]
    %v71 = vld [vmem:[#allocation2] sm:$0x1]
    %v73 = vperm.slane %v71, 0
    %v91 = vunpack.c.l.b16 %v55
    %v92 = vunpack.c.l.b16 %v56
    %v93 = vunpack.c.l.b16 %v57
    %v94 = vunpack.c.l.b16 %v58
    %v95 = vunpack.c.l.b16 %v59
    %v96 = vunpack.c.l.b16 %v60
    %v97 = vunpack.c.l.b16 %v61
    %v98 = vunpack.c.l.b16 %v62
    %v99 = vunpack.c.l.b16 %v63
    %v100 = vunpack.c.l.b16 %v64
    %v101 = vunpack.c.l.b16 %v65
    %v102 = vunpack.c.l.b16 %v66
    %v103 = vunpack.c.l.b16 %v67
    %v104 = vunpack.c.l.b16 %v68
    %v105 = vunpack.c.l.b16 %v69
    %v106 = vunpack.c.l.b16 %v70
    %v107 = vpack.c.b16 %v92, %v91
    %v108 = vpack.c.b16 %v94, %v93
    %v109 = vpack.c.b16 %v96, %v95
    %v110 = vpack.c.b16 %v98, %v97
    %v111 = vpack.c.b16 %v100, %v99
    %v112 = vpack.c.b16 %v102, %v101
    %v113 = vpack.c.b16 %v104, %v103
    %v114 = vpack.c.b16 %v106, %v105
    %123 = vmatpush.bf16.msra.mxu0 %v114
    %124 = vmatpush.bf16.msra.mxu0 %v113
    %125 = vmatpush.bf16.msra.mxu0 %v112
    %126 = vmatpush.bf16.msra.mxu0 %v111
    %127 = vmatpush.bf16.msra.mxu0 %v110
    %128 = vmatpush.bf16.msra.mxu0 %v109
    %129 = vmatpush.bf16.msra.mxu0 %v108
    %130 = vmatpush.bf16.msra.mxu0 %v107
    %131 = vmatmul.bf16.gmra.mxu0 %v54
    %v132 = vpop.f32.mrf.mxu0
    %v133 = vadd.f32 %v73, %v132
    %v134 = vpop.f32.mrf.mxu0
    %135 = vdwg.mxu0
    %v136 = vmax.f32 %v133, 0.0
    %v137 = vpack.c.bf16 %v136, %v136
    %v138 = vld [vmem:[%s3] sm:$0xf]
    %v139 = vld [vmem:[%s3 + $0x4] sm:$0xf]
    %v140 = vld [vmem:[%s3 + $0x8] sm:$0xf]
    %v141 = vld [vmem:[%s3 + $0xc] sm:$0xf]
    %v142 = vld [vmem:[%s3 + $0x10] sm:$0xf]
    %v143 = vld [vmem:[%s3 + $0x14] sm:$0xf]
    %v144 = vld [vmem:[%s3 + $0x18] sm:$0xf]
    %v145 = vld [vmem:[%s3 + $0x1c] sm:$0xf]
    %v146 = vld [vmem:[%s3 + $0x20] sm:$0xf]
    %v147 = vld [vmem:[%s3 + $0x24] sm:$0xf]
    %v148 = vld [vmem:[%s3 + $0x28] sm:$0xf]
    %v149 = vld [vmem:[%s3 + $0x2c] sm:$0xf]
    %v150 = vld [vmem:[%s3 + $0x30] sm:$0xf]
    %v151 = vld [vmem:[%s3 + $0x34] sm:$0xf]
    %v152 = vld [vmem:[%s3 + $0x38] sm:$0xf]
    %v153 = vld [vmem:[%s3 + $0x3c] sm:$0xf]
    %v154 = vld [vmem:[#allocation4] sm:$0x1]
    %v156 = vperm.slane %v154, 0
    %v174 = vunpack.c.l.b16 %v138
    %v175 = vunpack.c.l.b16 %v139
    %v176 = vunpack.c.l.b16 %v140
    %v177 = vunpack.c.l.b16 %v141
    %v178 = vunpack.c.l.b16 %v142
    %v179 = vunpack.c.l.b16 %v143
    %v180 = vunpack.c.l.b16 %v144
    %v181 = vunpack.c.l.b16 %v145
    %v182 = vunpack.c.l.b16 %v146
    %v183 = vunpack.c.l.b16 %v147
    %v184 = vunpack.c.l.b16 %v148
    %v185 = vunpack.c.l.b16 %v149
    %v186 = vunpack.c.l.b16 %v150
    %v187 = vunpack.c.l.b16 %v151
    %v188 = vunpack.c.l.b16 %v152
    %v189 = vunpack.c.l.b16 %v153
    %v190 = vpack.c.b16 %v175, %v174
    %v191 = vpack.c.b16 %v177, %v176
    %v192 = vpack.c.b16 %v179, %v178
    %v193 = vpack.c.b16 %v181, %v180
    %v194 = vpack.c.b16 %v183, %v182
    %v195 = vpack.c.b16 %v185, %v184
    %v196 = vpack.c.b16 %v187, %v186
    %v197 = vpack.c.b16 %v189, %v188
    %206 = vmatpush.bf16.msra.mxu0 %v197
    %207 = vmatpush.bf16.msra.mxu0 %v196
    %208 = vmatpush.bf16.msra.mxu0 %v195
    %209 = vmatpush.bf16.msra.mxu0 %v194
    %210 = vmatpush.bf16.msra.mxu0 %v193
    %211 = vmatpush.bf16.msra.mxu0 %v192
    %212 = vmatpush.bf16.msra.mxu0 %v191
    %213 = vmatpush.bf16.msra.mxu0 %v190
    %214 = vmatmul.bf16.gmra.mxu0 %v137
    %v215 = vpop.f32.mrf.mxu0
    %v216 = vadd.f32 %v156, %v215
    %v217 = vpop.f32.mrf.mxu0
    %218 = vdwg.mxu0
    %v219 = vmax.f32 %v216, 0.0
    %v220 = vld [vmem:[%s5] sm:$0xff]
    %v221 = vld [vmem:[%s5 + $0x8] sm:$0xff]
    %v222 = vld [vmem:[%s5 + $0x10] sm:$0xff]
    %v223 = vld [vmem:[%s5 + $0x18] sm:$0xff]
    %v224 = vld [vmem:[%s5 + $0x20] sm:$0xff]
    %v225 = vld [vmem:[%s5 + $0x28] sm:$0xff]
    %v226 = vld [vmem:[%s5 + $0x30] sm:$0xff]
    %v227 = vld [vmem:[%s5 + $0x38] sm:$0xff]
    %v228 = vld [vmem:[%s5 + $0x40] sm:$0xff]
    %v229 = vld [vmem:[%s5 + $0x48] sm:$0xff]
    %v230 = vld [vmem:[%s5 + $0x50] sm:$0xff]
    %v231 = vld [vmem:[%s5 + $0x58] sm:$0xff]
    %v232 = vld [vmem:[%s5 + $0x60] sm:$0xff]
    %v233 = vld [vmem:[%s5 + $0x68] sm:$0xff]
    %v234 = vld [vmem:[%s5 + $0x70] sm:$0xff]
    %v235 = vld [vmem:[%s5 + $0x78] sm:$0xff]
    %v236 = vld [vmem:[%s6] sm:$0x1]
    %v238 = vperm.slane %v236, 0
    %240 = vmatpush.msra.mxu0 %v235
    %241 = vmatpush.msra.mxu0 %v234
    %242 = vmatpush.msra.mxu0 %v233
    %243 = vmatpush.msra.mxu0 %v232
    %244 = vmatpush.msra.mxu0 %v231
    %245 = vmatpush.msra.mxu0 %v230
    %246 = vmatpush.msra.mxu0 %v229
    %247 = vmatpush.msra.mxu0 %v228
    %248 = vmatpush.msra.mxu0 %v227
    %249 = vmatpush.msra.mxu0 %v226
    %250 = vmatpush.msra.mxu0 %v225
    %251 = vmatpush.msra.mxu0 %v224
    %252 = vmatpush.msra.mxu0 %v223
    %253 = vmatpush.msra.mxu0 %v222
    %254 = vmatpush.msra.mxu0 %v221
    %255 = vmatpush.msra.mxu0 %v220
    %256 = vmatmul.f32.gmra.mxu0 %v219
    %v257 = vpop.f32.mrf.mxu0
    %v258 = vadd.f32 %v238, %v257
    %259 = vdwg.mxu0
    %vm260 = vcmask 31744
    %261 = vst.msk [vmem:[%s7] sm:$0xff] %vm260, %v258
    // Predicated region
    $region38: #{tpu_custom_call.1} parent=1 // pred_check
      _
    $region39: #{tpu_custom_call.1} parent=1 // pred_check_branch
      %263 = sbr.rel (0) target = $region41
    $region40: #{tpu_custom_call.1} parent=1 // pred_region
      _
    $region41: #{tpu_custom_call.1} parent=1 // pred_fallthru
      _
    // Predicated region
    $region42: #{tpu_custom_call.1} parent=1 // pred_check
      _
    $region43: #{tpu_custom_call.1} parent=1 // pred_check_branch
      %265 = sbr.rel (0) target = $region45
    $region44: #{tpu_custom_call.1} parent=1 // pred_region
      _
    $region45: #{tpu_custom_call.1} parent=1 // pred_fallthru
      _
    %266 = vsyncpa [#allocation3], 1
    %267 = vsyncpa [#allocation5], 1

</llo_original>
